<compile_context>
chip_gen: v7x
topology: tpu7x:2x2x1
jax: 0.10.0
libtpu: 0.0.40
codegen_flags: <defaults>
</compile_context>

<pallas_src>
import functools

import jax
import jax.numpy as jnp
from jax.experimental import pallas as pl
from jax.experimental.pallas import tpu as pltpu


def _round_up(x, m):
    return (x + m - 1) // m * m


# --------------------------------------------------------------------------- #
# Parameter preparation (done once, outside the per-call path).
# --------------------------------------------------------------------------- #
def prepare_params(params, num_heads):
    """Pre-transpose, zero-pad to lane-dense shapes, fold softmax scale into K,
    and cast matmul weights to bf16."""
    wqkv = params["wqkv"]          # (3*dim_out, dim)   (PyTorch Linear: (out, in))
    bqkv = params["bqkv"]          # (3*dim_out,)
    wproj = params["wproj"]        # (dim_out, dim_out)
    bproj = params["bproj"]        # (dim_out,)

    three_dim_out, dim = wqkv.shape
    dim_out = three_dim_out // 3
    head_dim = dim_out // num_heads
    scale = head_dim ** (-0.5)

    dp = _round_up(dim, 128)           # padded input channels
    hdp = _round_up(head_dim, 128)     # padded per-head dim
    hhd = num_heads * hdp              # all heads, lane-concatenated
    dop = _round_up(dim_out, 128)      # padded output channels

    def _chunk(i):
        return wqkv[i * dim_out:(i + 1) * dim_out], bqkv[i * dim_out:(i + 1) * dim_out]

    def _pad_in_proj(w, b, mul=1.0):
        # w: (dim_out, dim) -> transposed, head-padded -> (dp, num_heads*hdp) bf16
        w = (w * mul).T.reshape(dim, num_heads, head_dim)
        w = jnp.pad(w, ((0, dp - dim), (0, 0), (0, hdp - head_dim)))
        w = w.reshape(dp, hhd).astype(jnp.bfloat16)
        b = (b * mul).reshape(num_heads, head_dim)
        b = jnp.pad(b, ((0, 0), (0, hdp - head_dim))).reshape(1, hhd).astype(jnp.float32)
        return w, b

    wq, bq = _pad_in_proj(*_chunk(0))             # Q (unscaled: used as residual)
    wk, bk = _pad_in_proj(*_chunk(1), mul=scale)  # softmax scale folded into K
    wv, bv = _pad_in_proj(*_chunk(2))

    # proj: (out, in) with in-index = h*head_dim + d  ->  (num_heads*hdp, dop) bf16
    wp = wproj.T.reshape(num_heads, head_dim, dim_out)
    wp = jnp.pad(wp, ((0, 0), (0, hdp - head_dim), (0, dop - dim_out)))
    wp = wp.reshape(hhd, dop).astype(jnp.bfloat16)
    bp = jnp.pad(bproj, (0, dop - dim_out)).reshape(1, dop).astype(jnp.float32)

    return dict(wq=wq, bq=bq, wk=wk, bk=bk, wv=wv, bv=bv, wp=wp, bp=bp,
                dim=dim, dim_out=dim_out, num_heads=num_heads,
                head_dim=head_dim, dp=dp, hdp=hdp, hhd=hhd, dop=dop)


# --------------------------------------------------------------------------- #
# Kernel 1: per-head attention.  grid = (batch b, head h, query tile qi).
# K/V are projected once per (b, h) into VMEM scratch; every qi reuses them.
# --------------------------------------------------------------------------- #
def _attn_kernel(x_ref, wq_ref, bq_ref, wk_ref, bk_ref, wv_ref, bv_ref,
                 o_ref, k_scr, v_scr, *, tq, n_real):
    qi = pl.program_id(2)
    n_pad = x_ref.shape[1]

    @pl.when(qi == 0)
    def _():
        xf = x_ref[0]                                                  # (N_pad, DP) bf16
        k = jnp.dot(xf, wk_ref[...], preferred_element_type=jnp.float32) + bk_ref[...]
        v = jnp.dot(xf, wv_ref[...], preferred_element_type=jnp.float32) + bv_ref[...]
        k_scr[...] = k.astype(jnp.bfloat16)                            # scale already in wk/bk
        v_scr[...] = v.astype(jnp.bfloat16)

    start = pl.multiple_of(qi * tq, tq)
    xq = x_ref[0, pl.ds(start, tq), :]                                 # (TQ, DP) bf16
    q = jnp.dot(xq, wq_ref[...], preferred_element_type=jnp.float32) + bq_ref[...]

    # scores = (q*scale) @ k^T  (scale folded into K); Mosaic handles trans_b on MXU.
    s = jax.lax.dot_general(
        q.astype(jnp.bfloat16), k_scr[...],
        dimension_numbers=(((1,), (1,)), ((), ())),
        preferred_element_type=jnp.float32)                            # (TQ, N_pad)

    if n_real < n_pad:   # static: mask padded key positions (K rows there == bk)
        key_ids = jax.lax.broadcasted_iota(jnp.int32, (1, n_pad), 1)
        s = jnp.where(key_ids < n_real, s, -1e30)

    m = jnp.max(s, axis=-1, keepdims=True)
    p = jnp.exp(s - m)
    denom = jnp.sum(p, axis=-1, keepdims=True)                         # (TQ, 1)

    o = jnp.dot(p.astype(jnp.bfloat16), v_scr[...],
                preferred_element_type=jnp.float32)                    # (TQ, HDP)
    # exact reciprocal: denom is only (TQ,1), exactness is essentially free.
    o = o * pl.reciprocal(denom, approx=False) + q                     # '+ q' residual
    o_ref[0] = o.astype(o_ref.dtype)


# --------------------------------------------------------------------------- #
# Kernel 2: head -> dim_out output projection.  grid = (batch b, query tile qi).
# --------------------------------------------------------------------------- #
def _proj_kernel(h_ref, wp_ref, bp_ref, o_ref):
    acc = jnp.dot(h_ref[0], wp_ref[...], preferred_element_type=jnp.float32)
    o_ref[0] = (acc + bp_ref[...]).astype(o_ref.dtype)


# --------------------------------------------------------------------------- #
# Wrapper.
# --------------------------------------------------------------------------- #
def multiscale_attention(x, p, hw_shape):
    B, N, dim = x.shape
    assert dim == p["dim"], "prepared params do not match input channel dim"
    num_heads = p["num_heads"]
    dp, hdp, hhd, dop = p["dp"], p["hdp"], p["hhd"], p["dop"]

    # query tile: fill the 256-wide v6e/v7x MXU when possible, stay sublane-aligned.
    if N >= 256:
        tq = 256
    elif N >= 128:
        tq = 128
    else:
        tq = _round_up(N, 8)
    n_pad = _round_up(N, tq)
    qt = n_pad // tq

    # bf16 input: the kernel only ever uses x as a bf16 MXU operand.
    x_pad = jnp.pad(x, ((0, 0), (0, n_pad - N), (0, dp - dim))).astype(jnp.bfloat16)

    attn_kernel = functools.partial(_attn_kernel, tq=tq, n_real=N)

    head_spec_w = pl.BlockSpec((dp, hdp), lambda b, h, qi: (0, h))
    head_spec_b = pl.BlockSpec((1, hdp), lambda b, h, qi: (0, h))

    # Pass 1: per-head attention -> (B, N_pad, num_heads*hdp) bf16.
    heads_out = pl.pallas_call(
        attn_kernel,
        out_shape=jax.ShapeDtypeStruct((B, n_pad, hhd), jnp.bfloat16),
        grid_spec=pltpu.PrefetchScalarGridSpec(
            num_scalar_prefetch=0,
            grid=(B, num_heads, qt),
            in_specs=[
                pl.BlockSpec((1, n_pad, dp), lambda b, h, qi: (b, 0, 0)),  # x (per batch)
                head_spec_w, head_spec_b,                                   # Wq, bq
                head_spec_w, head_spec_b,                                   # Wk, bk (scaled)
                head_spec_w, head_spec_b,                                   # Wv, bv
            ],
            out_specs=pl.BlockSpec((1, tq, hdp), lambda b, h, qi: (b, qi, h)),
            scratch_shapes=[pltpu.VMEM((n_pad, hdp), jnp.bfloat16),         # K (scaled, +bias)
                            pltpu.VMEM((n_pad, hdp), jnp.bfloat16)],        # V (+bias)
        ),
        compiler_params=pltpu.CompilerParams(
            dimension_semantics=("parallel", "parallel", "arbitrary"),
            vmem_limit_bytes=48 * 1024 * 1024,
        ),
    )(x_pad, p["wq"], p["bq"], p["wk"], p["bk"], p["wv"], p["bv"])

    # Pass 2: output projection -> (B, N_pad, dop) f32.
    out = pl.pallas_call(
        _proj_kernel,
        out_shape=jax.ShapeDtypeStruct((B, n_pad, dop), jnp.float32),
        grid_spec=pltpu.PrefetchScalarGridSpec(
            num_scalar_prefetch=0,
            grid=(B, qt),
            in_specs=[
                pl.BlockSpec((1, tq, hhd), lambda b, qi: (b, qi, 0)),   # per-head outputs
                pl.BlockSpec((hhd, dop), lambda b, qi: (0, 0)),         # Wproj (resident)
                pl.BlockSpec((1, dop), lambda b, qi: (0, 0)),           # bproj
            ],
            out_specs=pl.BlockSpec((1, tq, dop), lambda b, qi: (b, qi, 0)),
        ),
        compiler_params=pltpu.CompilerParams(
            dimension_semantics=("parallel", "parallel"),
            vmem_limit_bytes=48 * 1024 * 1024,
        ),
    )(heads_out, p["wp"], p["bp"])

    out = out[:, :N, :p["dim_out"]]
    return out, list(hw_shape)   # q_shape == hw_shape (identity pooling)


# --------------------------------------------------------------------------- #
# Pure-JAX f32 reference (mirrors the PyTorch forward, default config).
# --------------------------------------------------------------------------- #
def _reference(x, params, num_heads):
    dim_out = params["wproj"].shape[0]
    hd = dim_out // num_heads
    B, N, _ = x.shape
    qkv = x @ params["wqkv"].T + params["bqkv"]
    qkv = qkv.reshape(B, N, 3, num_heads, hd).transpose(2, 0, 3, 1, 4)
    q, k, v = qkv[0], qkv[1], qkv[2]
    attn = jax.nn.softmax((q * hd ** (-0.5)) @ jnp.swapaxes(k, -2, -1), axis=-1)
    o = attn @ v + q
    o = jnp.swapaxes(o, 1, 2).reshape(B, N, dim_out)
    return o @ params["wproj"].T + params["bproj"]


if __name__ == "__main__":
    B, H, W = 2, 4, 4
    N = H * W
    dim = dim_out = 32
    num_heads = 4

    key = jax.random.PRNGKey(0)
    ks = jax.random.split(key, 5)
    f32 = jnp.float32
    params = {
        "wqkv": 0.02 * jax.random.normal(ks[1], (3 * dim_out, dim), f32),
        "bqkv": 0.01 * jax.random.normal(ks[2], (3 * dim_out,), f32),
        "wproj": 0.02 * jax.random.normal(ks[3], (dim_out, dim_out), f32),
        "bproj": 0.01 * jax.random.normal(ks[4], (dim_out,), f32),
    }
    x = jax.random.normal(ks[0], (B, N, dim), f32)

    prepared = prepare_params(params, num_heads)
    out, q_shape = multiscale_attention(x, prepared, (H, W))
    out = jax.block_until_ready(out)

    ref = _reference(x, params, num_heads)
    assert out.shape == (B, N, dim_out)
    assert q_shape == [H, W]
    max_err = float(jnp.max(jnp.abs(out - ref)))
    assert jnp.allclose(out, ref, atol=2e-2, rtol=2e-2), f"max abs err {max_err}"
    print("KERNEL_OK")
</pallas_src>

<mosaic_0001>
module attributes {stable_mosaic.version = 11 : i64} {
  func.func @_attn_kernel(%arg0: i32, %arg1: i32, %arg2: i32, %arg3: memref<1x16x128xbf16, #tpu.memory_space<vmem>>, %arg4: memref<128x128xbf16, #tpu.memory_space<vmem>>, %arg5: memref<1x128xf32, #tpu.memory_space<vmem>>, %arg6: memref<128x128xbf16, #tpu.memory_space<vmem>>, %arg7: memref<1x128xf32, #tpu.memory_space<vmem>>, %arg8: memref<128x128xbf16, #tpu.memory_space<vmem>>, %arg9: memref<1x128xf32, #tpu.memory_space<vmem>>, %arg10: memref<1x16x128xbf16, #tpu.memory_space<vmem>>, %arg11: memref<16x128xbf16, #tpu.memory_space<vmem>>, %arg12: memref<16x128xbf16, #tpu.memory_space<vmem>>) attributes {dimension_semantics = [#tpu.dimension_semantics<parallel>, #tpu.dimension_semantics<parallel>, #tpu.dimension_semantics<arbitrary>], iteration_bounds = array<i64: 2, 4, 1>, scalar_prefetch = 0 : i64, scratch_operands = 2 : i64, tpu.core_type = #tpu.core_type<tc>, window_params = [{transform_indices = @transform_0, window_bounds = array<i64: 1, 16, 128>}, {transform_indices = @transform_1, window_bounds = array<i64: 128, 128>}, {transform_indices = @transform_2, window_bounds = array<i64: 1, 128>}, {transform_indices = @transform_3, window_bounds = array<i64: 128, 128>}, {transform_indices = @transform_4, window_bounds = array<i64: 1, 128>}, {transform_indices = @transform_5, window_bounds = array<i64: 128, 128>}, {transform_indices = @transform_6, window_bounds = array<i64: 1, 128>}, {transform_indices = @transform_7, window_bounds = array<i64: 1, 16, 128>}]} {
    %c0_i32 = arith.constant 0 : i32
    %0 = arith.cmpi eq, %arg2, %c0_i32 : i32
    %1 = arith.extui %0 : i1 to i32
    %c0_i32_0 = arith.constant 0 : i32
    %2 = arith.cmpi ne, %1, %c0_i32_0 : i32
    scf.if %2 {
      %c0_17 = arith.constant 0 : index
      %c0_18 = arith.constant 0 : index
      %c0_19 = arith.constant 0 : index
      %34 = vector.load %arg3[%c0_17, %c0_18, %c0_19] : memref<1x16x128xbf16, #tpu.memory_space<vmem>>, vector<1x16x128xbf16>
      %35 = vector.shape_cast %34 : vector<1x16x128xbf16> to vector<16x128xbf16>
      %c0_20 = arith.constant 0 : index
      %c0_21 = arith.constant 0 : index
      %36 = vector.load %arg6[%c0_20, %c0_21] : memref<128x128xbf16, #tpu.memory_space<vmem>>, vector<128x128xbf16>
      %cst_22 = arith.constant dense<0.000000e+00> : vector<16x128xf32>
      %37 = tpu.matmul %35, %36, %cst_22 {dimension_numbers = #tpu.dot_dimension_numbers<[1], [0], [0], [1], [0, 0, 1, 1], [], []>} : vector<16x128xbf16>, vector<128x128xbf16>, vector<16x128xf32> -> vector<16x128xf32>
      %c0_23 = arith.constant 0 : index
      %c0_24 = arith.constant 0 : index
      %38 = vector.load %arg7[%c0_23, %c0_24] : memref<1x128xf32, #tpu.memory_space<vmem>>, vector<1x128xf32>
      %39 = vector.broadcast %38 : vector<1x128xf32> to vector<16x128xf32>
      %40 = arith.addf %37, %39 : vector<16x128xf32>
      %c0_25 = arith.constant 0 : index
      %c0_26 = arith.constant 0 : index
      %41 = vector.load %arg8[%c0_25, %c0_26] : memref<128x128xbf16, #tpu.memory_space<vmem>>, vector<128x128xbf16>
      %cst_27 = arith.constant dense<0.000000e+00> : vector<16x128xf32>
      %42 = tpu.matmul %35, %41, %cst_27 {dimension_numbers = #tpu.dot_dimension_numbers<[1], [0], [0], [1], [0, 0, 1, 1], [], []>} : vector<16x128xbf16>, vector<128x128xbf16>, vector<16x128xf32> -> vector<16x128xf32>
      %c0_28 = arith.constant 0 : index
      %c0_29 = arith.constant 0 : index
      %43 = vector.load %arg9[%c0_28, %c0_29] : memref<1x128xf32, #tpu.memory_space<vmem>>, vector<1x128xf32>
      %44 = vector.broadcast %43 : vector<1x128xf32> to vector<16x128xf32>
      %45 = arith.addf %42, %44 : vector<16x128xf32>
      %46 = arith.truncf %40 : vector<16x128xf32> to vector<16x128xbf16>
      %c0_30 = arith.constant 0 : index
      %c0_31 = arith.constant 0 : index
      %47 = vector.load %arg11[%c0_30, %c0_31] : memref<16x128xbf16, #tpu.memory_space<vmem>>, vector<16x128xbf16>
      tpu.vector_store %arg11[%c0_30, %c0_31], %46 {strides = array<i32>} : memref<16x128xbf16, #tpu.memory_space<vmem>>, vector<16x128xbf16>,
      %48 = arith.truncf %45 : vector<16x128xf32> to vector<16x128xbf16>
      %c0_32 = arith.constant 0 : index
      %c0_33 = arith.constant 0 : index
      %49 = vector.load %arg12[%c0_32, %c0_33] : memref<16x128xbf16, #tpu.memory_space<vmem>>, vector<16x128xbf16>
      tpu.vector_store %arg12[%c0_32, %c0_33], %48 {strides = array<i32>} : memref<16x128xbf16, #tpu.memory_space<vmem>>, vector<16x128xbf16>,
    } else {
    }
    %c16_i32 = arith.constant 16 : i32
    %3 = arith.muli %arg2, %c16_i32 : i32
    %4 = tpu.assume_multiple %3, 16 : i32
    %c0 = arith.constant 0 : index
    %5 = arith.index_cast %4 : i32 to index
    %c0_1 = arith.constant 0 : index
    %6 = vector.load %arg3[%c0, %5, %c0_1] : memref<1x16x128xbf16, #tpu.memory_space<vmem>>, vector<1x16x128xbf16>
    %7 = vector.shape_cast %6 : vector<1x16x128xbf16> to vector<16x128xbf16>
    %c0_2 = arith.constant 0 : index
    %c0_3 = arith.constant 0 : index
    %8 = vector.load %arg4[%c0_2, %c0_3] : memref<128x128xbf16, #tpu.memory_space<vmem>>, vector<128x128xbf16>
    %cst = arith.constant dense<0.000000e+00> : vector<16x128xf32>
    %9 = tpu.matmul %7, %8, %cst {dimension_numbers = #tpu.dot_dimension_numbers<[1], [0], [0], [1], [0, 0, 1, 1], [], []>} : vector<16x128xbf16>, vector<128x128xbf16>, vector<16x128xf32> -> vector<16x128xf32>
    %c0_4 = arith.constant 0 : index
    %c0_5 = arith.constant 0 : index
    %10 = vector.load %arg5[%c0_4, %c0_5] : memref<1x128xf32, #tpu.memory_space<vmem>>, vector<1x128xf32>
    %11 = vector.broadcast %10 : vector<1x128xf32> to vector<16x128xf32>
    %12 = arith.addf %9, %11 : vector<16x128xf32>
    %13 = arith.truncf %12 : vector<16x128xf32> to vector<16x128xbf16>
    %c0_6 = arith.constant 0 : index
    %c0_7 = arith.constant 0 : index
    %14 = vector.load %arg11[%c0_6, %c0_7] : memref<16x128xbf16, #tpu.memory_space<vmem>>, vector<16x128xbf16>
    %cst_8 = arith.constant dense<0.000000e+00> : vector<16x16xf32>
    %15 = tpu.matmul %13, %14, %cst_8 {dimension_numbers = #tpu.dot_dimension_numbers<[1], [1], [0], [0], [0, 0, 1, 0], [], []>} : vector<16x128xbf16>, vector<16x128xbf16>, vector<16x16xf32> -> vector<16x16xf32>
    %cst_9 = arith.constant dense<0xFF800000> : vector<16xf32>
    %16 = vector.multi_reduction <maximumf>, %15, %cst_9 [1] : vector<16x16xf32> to vector<16xf32>
    %17 = vector.shape_cast %16 : vector<16xf32> to vector<16x1xf32>
    %18 = vector.broadcast %17 : vector<16x1xf32> to vector<16x16xf32>
    %19 = arith.subf %15, %18 : vector<16x16xf32>
    %20 = math.exp %19 : vector<16x16xf32>
    %cst_10 = arith.constant dense<0.000000e+00> : vector<16xf32>
    %21 = vector.multi_reduction <add>, %20, %cst_10 [1] : vector<16x16xf32> to vector<16xf32>
    %22 = vector.shape_cast %21 : vector<16xf32> to vector<16x1xf32>
    %23 = arith.truncf %20 : vector<16x16xf32> to vector<16x16xbf16>
    %c0_11 = arith.constant 0 : index
    %c0_12 = arith.constant 0 : index
    %24 = vector.load %arg12[%c0_11, %c0_12] : memref<16x128xbf16, #tpu.memory_space<vmem>>, vector<16x128xbf16>
    %cst_13 = arith.constant dense<0.000000e+00> : vector<16x128xf32>
    %25 = tpu.matmul %23, %24, %cst_13 {dimension_numbers = #tpu.dot_dimension_numbers<[1], [0], [0], [1], [0, 0, 1, 1], [], []>} : vector<16x16xbf16>, vector<16x128xbf16>, vector<16x128xf32> -> vector<16x128xf32>
    %26 = tpu.reciprocal %22 : vector<16x1xf32> -> vector<16x1xf32>
    %27 = vector.broadcast %26 : vector<16x1xf32> to vector<16x128xf32>
    %28 = arith.mulf %25, %27 : vector<16x128xf32>
    %29 = arith.addf %28, %12 : vector<16x128xf32>
    %30 = arith.truncf %29 : vector<16x128xf32> to vector<16x128xbf16>
    %c0_14 = arith.constant 0 : index
    %c0_15 = arith.constant 0 : index
    %c0_16 = arith.constant 0 : index
    %31 = vector.load %arg10[%c0_14, %c0_15, %c0_16] : memref<1x16x128xbf16, #tpu.memory_space<vmem>>, vector<1x16x128xbf16>
    %32 = vector.shape_cast %31 : vector<1x16x128xbf16> to vector<16x128xbf16>
    %33 = vector.shape_cast %30 : vector<16x128xbf16> to vector<1x16x128xbf16>
    tpu.vector_store %arg10[%c0_14, %c0_15, %c0_16], %33 {strides = array<i32>} : memref<1x16x128xbf16, #tpu.memory_space<vmem>>, vector<1x16x128xbf16>,
    return
  }
  func.func @transform_0(%arg0: i32, %arg1: i32, %arg2: i32) -> (i32, i32, i32) {
    %c0_i32 = arith.constant 0 : i32
    %c0_i32_0 = arith.constant 0 : i32
    %c0_i32_1 = arith.constant 0 : i32
    return %arg0, %c0_i32, %c0_i32_0 : i32, i32, i32
  }
  func.func @transform_1(%arg0: i32, %arg1: i32, %arg2: i32) -> (i32, i32) {
    %c0_i32 = arith.constant 0 : i32
    %c0_i32_0 = arith.constant 0 : i32
    return %c0_i32, %arg1 : i32, i32
  }
  func.func @transform_2(%arg0: i32, %arg1: i32, %arg2: i32) -> (i32, i32) {
    %c0_i32 = arith.constant 0 : i32
    %c0_i32_0 = arith.constant 0 : i32
    return %c0_i32, %arg1 : i32, i32
  }
  func.func @transform_3(%arg0: i32, %arg1: i32, %arg2: i32) -> (i32, i32) {
    %c0_i32 = arith.constant 0 : i32
    %c0_i32_0 = arith.constant 0 : i32
    return %c0_i32, %arg1 : i32, i32
  }
  func.func @transform_4(%arg0: i32, %arg1: i32, %arg2: i32) -> (i32, i32) {
    %c0_i32 = arith.constant 0 : i32
    %c0_i32_0 = arith.constant 0 : i32
    return %c0_i32, %arg1 : i32, i32
  }
  func.func @transform_5(%arg0: i32, %arg1: i32, %arg2: i32) -> (i32, i32) {
    %c0_i32 = arith.constant 0 : i32
    %c0_i32_0 = arith.constant 0 : i32
    return %c0_i32, %arg1 : i32, i32
  }
  func.func @transform_6(%arg0: i32, %arg1: i32, %arg2: i32) -> (i32, i32) {
    %c0_i32 = arith.constant 0 : i32
    %c0_i32_0 = arith.constant 0 : i32
    return %c0_i32, %arg1 : i32, i32
  }
  func.func @transform_7(%arg0: i32, %arg1: i32, %arg2: i32) -> (i32, i32, i32) {
    %c0_i32 = arith.constant 0 : i32
    return %arg0, %arg2, %arg1 : i32, i32, i32
  }
}

</mosaic_0001>

<llo_original>
// kernel: tpu_custom_call.1
$region0: #{tpu_custom_call.1}
  #allocation0 [shape = 'u32[]', space=smem, size = 0x4, offset = 0x4, fixed_abs, tag = 'smem constant byte address 0x4 - core index']
  #allocation1 [shape = 'u32[144,128]{1,0:T(1,128)}', space=vmem, size = 0x12000, scoped, tag = 'internal scratch']
  #allocation2 [shape = 'bf16[16,128]{1,0:T(16,128)(2,1)}', space=vmem, size = 0x1000, scoped, tag = 'scratch operand']
  #allocation3 [shape = 'bf16[16,128]{1,0:T(16,128)(2,1)}', space=vmem, size = 0x1000, scoped, tag = 'scratch operand']
  %s0 = inlined_call_operand.hbm [shape: bf16[2,16,128], index: 0, kind: input, shape index: {}]
  %s1 = inlined_call_operand.hbm [shape: bf16[128,512], index: 1, kind: input, shape index: {}]
  %s2 = inlined_call_operand.vmem [shape: f32[1,512], index: 2, kind: input, shape index: {}]
  %s3 = inlined_call_operand.hbm [shape: bf16[128,512], index: 3, kind: input, shape index: {}]
  %s4 = inlined_call_operand.vmem [shape: f32[1,512], index: 4, kind: input, shape index: {}]
  %s5 = inlined_call_operand.hbm [shape: bf16[128,512], index: 5, kind: input, shape index: {}]
  %s6 = inlined_call_operand.vmem [shape: f32[1,512], index: 6, kind: input, shape index: {}]
  %s7 = inlined_call_operand.hbm [shape: bf16[2,16,512], index: 7, kind: output, shape index: {}]
  %s8 = sld [smem:[#allocation0]]
  $region81: #{tpu_custom_call.1} parent=0
    _
  %s10 = ssub.s32 1, %s8
  %s11 = scalar_select 0, %s10, %s8
  $region1: #{tpu_custom_call.1} parent=0
    #allocation4 [shape = 'u8[8192]{0}', space=vmem, size = 0x2000, scoped, tag = 'input window, operand 0']
    #allocation5 [shape = 's32[2]{0}', space=sflag, size = 0x8, scoped, tag = 'scoped memory for tpu_custom_call.1']
    #allocation6 [shape = 's32[2]{0}', space=sflag, size = 0x8, scoped, tag = 'scoped memory for tpu_custom_call.1']
    #allocation7 [shape = 'u8[65536]{0}', space=vmem, size = 0x10000, scoped, tag = 'input window, operand 1']
    #allocation8 [shape = 's32[2]{0}', space=sflag, size = 0x8, scoped, tag = 'scoped memory for tpu_custom_call.1']
    #allocation9 [shape = 'u8[65536]{0}', space=vmem, size = 0x10000, scoped, tag = 'input window, operand 3']
    #allocation10 [shape = 'u8[65536]{0}', space=vmem, size = 0x10000, scoped, tag = 'input window, operand 5']
    #allocation11 [shape = 's32[2]{0}', space=sflag, size = 0x8, scoped, tag = 'scoped memory for tpu_custom_call.1']
    #allocation12 [shape = 'u8[8192]{0}', space=vmem, size = 0x2000, scoped, tag = 'output window, operand 0']
    %12 = vsyncpa [#allocation5], 0
    %s13 = scalar_lea.sflag [#allocation5], 1
    %14 = vsyncpa %s13, 0
    %15 = vsyncpa [#allocation8], 0
    %s16 = scalar_lea.sflag [#allocation8], 1
    %17 = vsyncpa %s16, 0
    %18 = vsyncpa [#allocation11], 0
    %s19 = scalar_lea.sflag [#allocation11], 1
    %20 = vsyncpa %s19, 0
    %21 = vsyncpa [#allocation6], 0
    %s22 = scalar_lea.sflag [#allocation6], 1
    %23 = vsyncpa %s22, 0
    loop: start=0, step=1, limit=10
    $region2: #{tpu_custom_call.1} parent=1 // loop_pre_header
      _
    $region3: #{tpu_custom_call.1} parent=1 // loop_header
      %s25 = sphi 0, %s29
      %p26 = scmp.ge.s32.totalorder %s25, 10
      %s32 = sphi 0, %s51
      %s33 = sphi 0, %s47
      %s34 = sphi 0, %s43
      %s35 = sphi 0, %s32
      %s36 = sphi 0, %s33
      %s37 = sphi 0, %s34
      %s38 = sphi 0, %s35
      %s39 = sphi 0, %s36
      %s40 = sphi 0, %s37
      %s54 = sphi 0, %s56
      %s57 = sphi 0, %s54
      %s58 = sphi 0, %s57
      %s74 = sphi 0, %s58
      %s80 = sphi 0, %s82
      %s83 = sphi 0, %s80
      %s84 = sphi 0, %s83
      %s100 = sphi 0, %s84
      %s106 = sphi 0, %s108
      %s109 = sphi 0, %s106
      %s110 = sphi 0, %s109
      %s126 = sphi 0, %s110
      %s132 = sphi 0, %s134
      %s135 = sphi 0, %s132
      %s136 = sphi 0, %s135
      %s152 = sphi 0, %s136
      %s158 = sphi 0, %s160
      %s161 = sphi 0, %s158
      %s162 = sphi 0, %s161
      %s178 = sphi 0, %s162
      %s184 = sphi 0, %s186
      %s187 = sphi 0, %s184
      %s188 = sphi 0, %s187
      %s204 = sphi 0, %s188
      %s210 = sphi 0, %s212
      %s213 = sphi 0, %s210
      %s214 = sphi 0, %s213
      %s230 = sphi 0, %s214
      %s240 = sphi 0, %s242
      %s243 = sphi 0, %s240
      %s244 = sphi 0, %s243
      %s260 = sphi 0, %s244
    $region4: #{tpu_custom_call.1} parent=1 // loop_header_branch
      %28 = sbr.rel (%p26) target = $region8
    $region5: #{tpu_custom_call.1} parent=1 // loop_body
      %s30 = ssub.s32 %s25, 1
      %s31 = ssub.s32 %s25, 2
      %s41 = sadd.s32 1, %s34
      %p42 = scmp.ge.s32.totalorder %s41, 1
      %s43 = scalar_select %p42, 0, %s41
      %s44 = sadd.s32 1, %s33
      %s45 = scalar_select %p42, %s44, %s33
      %p46 = scmp.ge.s32.totalorder %s45, 4
      %s47 = scalar_select %p46, 0, %s45
      %s48 = sadd.s32 1, %s32
      %s49 = scalar_select %p46, %s48, %s32
      %p50 = scmp.ge.s32.totalorder %s49, 2
      %s51 = scalar_select %p50, 0, %s49
      %s52 = ssub.s32 %s32, %s51
      %p53 = scmp.eq.s32.totalorder %s52, 0
      %s55 = sadd.s32 %s54, 1
      %s56 = scalar_select %p53, %s54, %s55
      %p59 = pneg %p53
      %p60 = scmp.eq.s32.totalorder %s25, 7
      %p61 = por %p59, %p60
      %p62 = scmp.ne.s32.totalorder %s54, %s57
      %p63 = scmp.eq.s32.totalorder %s25, 0
      %p64 = por %p62, %p63
      %p65 = scmp.ne.s32.totalorder %s54, %s57
      %p66 = scmp.eq.s32.totalorder %s30, 7
      %p67 = por %p65, %p66
      %p68 = scmp.ne.s32.totalorder %s57, %s58
      %p69 = scmp.eq.s32.totalorder %s30, 0
      %p70 = por %p68, %p69
      %p71 = scmp.ne.s32.totalorder %s57, %s58
      %p72 = scmp.eq.s32.totalorder %s31, 7
      %p73 = por %p71, %p72
      %p75 = scmp.ne.s32.totalorder %s58, %s74
      %p76 = scmp.eq.s32.totalorder %s31, 0
      %p77 = por %p75, %p76
      %s78 = ssub.s32 %s33, %s47
      %p79 = scmp.eq.s32.totalorder %s78, 0
      %s81 = sadd.s32 %s80, 1
      %s82 = scalar_select %p79, %s80, %s81
      %p85 = pneg %p79
      %p86 = scmp.eq.s32.totalorder %s25, 7
      %p87 = por %p85, %p86
      %p88 = scmp.ne.s32.totalorder %s80, %s83
      %p89 = scmp.eq.s32.totalorder %s25, 0
      %p90 = por %p88, %p89
      %p91 = scmp.ne.s32.totalorder %s80, %s83
      %p92 = scmp.eq.s32.totalorder %s30, 7
      %p93 = por %p91, %p92
      %p94 = scmp.ne.s32.totalorder %s83, %s84
      %p95 = scmp.eq.s32.totalorder %s30, 0
      %p96 = por %p94, %p95
      %p97 = scmp.ne.s32.totalorder %s83, %s84
      %p98 = scmp.eq.s32.totalorder %s31, 7
      %p99 = por %p97, %p98
      %p101 = scmp.ne.s32.totalorder %s84, %s100
      %p102 = scmp.eq.s32.totalorder %s31, 0
      %p103 = por %p101, %p102
      %s104 = ssub.s32 %s33, %s47
      %p105 = scmp.eq.s32.totalorder %s104, 0
      %s107 = sadd.s32 %s106, 1
      %s108 = scalar_select %p105, %s106, %s107
      %p111 = pneg %p105
      %p112 = scmp.eq.s32.totalorder %s25, 7
      %p113 = por %p111, %p112
      %p114 = scmp.ne.s32.totalorder %s106, %s109
      %p115 = scmp.eq.s32.totalorder %s25, 0
      %p116 = por %p114, %p115
      %p117 = scmp.ne.s32.totalorder %s106, %s109
      %p118 = scmp.eq.s32.totalorder %s30, 7
      %p119 = por %p117, %p118
      %p120 = scmp.ne.s32.totalorder %s109, %s110
      %p121 = scmp.eq.s32.totalorder %s30, 0
      %p122 = por %p120, %p121
      %p123 = scmp.ne.s32.totalorder %s109, %s110
      %p124 = scmp.eq.s32.totalorder %s31, 7
      %p125 = por %p123, %p124
      %p127 = scmp.ne.s32.totalorder %s110, %s126
      %p128 = scmp.eq.s32.totalorder %s31, 0
      %p129 = por %p127, %p128
      %s130 = ssub.s32 %s33, %s47
      %p131 = scmp.eq.s32.totalorder %s130, 0
      %s133 = sadd.s32 %s132, 1
      %s134 = scalar_select %p131, %s132, %s133
      %p137 = pneg %p131
      %p138 = scmp.eq.s32.totalorder %s25, 7
      %p139 = por %p137, %p138
      %p140 = scmp.ne.s32.totalorder %s132, %s135
      %p141 = scmp.eq.s32.totalorder %s25, 0
      %p142 = por %p140, %p141
      %p143 = scmp.ne.s32.totalorder %s132, %s135
      %p144 = scmp.eq.s32.totalorder %s30, 7
      %p145 = por %p143, %p144
      %p146 = scmp.ne.s32.totalorder %s135, %s136
      %p147 = scmp.eq.s32.totalorder %s30, 0
      %p148 = por %p146, %p147
      %p149 = scmp.ne.s32.totalorder %s135, %s136
      %p150 = scmp.eq.s32.totalorder %s31, 7
      %p151 = por %p149, %p150
      %p153 = scmp.ne.s32.totalorder %s136, %s152
      %p154 = scmp.eq.s32.totalorder %s31, 0
      %p155 = por %p153, %p154
      %s156 = ssub.s32 %s33, %s47
      %p157 = scmp.eq.s32.totalorder %s156, 0
      %s159 = sadd.s32 %s158, 1
      %s160 = scalar_select %p157, %s158, %s159
      %p163 = pneg %p157
      %p164 = scmp.eq.s32.totalorder %s25, 7
      %p165 = por %p163, %p164
      %p166 = scmp.ne.s32.totalorder %s158, %s161
      %p167 = scmp.eq.s32.totalorder %s25, 0
      %p168 = por %p166, %p167
      %p169 = scmp.ne.s32.totalorder %s158, %s161
      %p170 = scmp.eq.s32.totalorder %s30, 7
      %p171 = por %p169, %p170
      %p172 = scmp.ne.s32.totalorder %s161, %s162
      %p173 = scmp.eq.s32.totalorder %s30, 0
      %p174 = por %p172, %p173
      %p175 = scmp.ne.s32.totalorder %s161, %s162
      %p176 = scmp.eq.s32.totalorder %s31, 7
      %p177 = por %p175, %p176
      %p179 = scmp.ne.s32.totalorder %s162, %s178
      %p180 = scmp.eq.s32.totalorder %s31, 0
      %p181 = por %p179, %p180
      %s182 = ssub.s32 %s33, %s47
      %p183 = scmp.eq.s32.totalorder %s182, 0
      %s185 = sadd.s32 %s184, 1
      %s186 = scalar_select %p183, %s184, %s185
      %p189 = pneg %p183
      %p190 = scmp.eq.s32.totalorder %s25, 7
      %p191 = por %p189, %p190
      %p192 = scmp.ne.s32.totalorder %s184, %s187
      %p193 = scmp.eq.s32.totalorder %s25, 0
      %p194 = por %p192, %p193
      %p195 = scmp.ne.s32.totalorder %s184, %s187
      %p196 = scmp.eq.s32.totalorder %s30, 7
      %p197 = por %p195, %p196
      %p198 = scmp.ne.s32.totalorder %s187, %s188
      %p199 = scmp.eq.s32.totalorder %s30, 0
      %p200 = por %p198, %p199
      %p201 = scmp.ne.s32.totalorder %s187, %s188
      %p202 = scmp.eq.s32.totalorder %s31, 7
      %p203 = por %p201, %p202
      %p205 = scmp.ne.s32.totalorder %s188, %s204
      %p206 = scmp.eq.s32.totalorder %s31, 0
      %p207 = por %p205, %p206
      %s208 = ssub.s32 %s33, %s47
      %p209 = scmp.eq.s32.totalorder %s208, 0
      %s211 = sadd.s32 %s210, 1
      %s212 = scalar_select %p209, %s210, %s211
      %p215 = pneg %p209
      %p216 = scmp.eq.s32.totalorder %s25, 7
      %p217 = por %p215, %p216
      %p218 = scmp.ne.s32.totalorder %s210, %s213
      %p219 = scmp.eq.s32.totalorder %s25, 0
      %p220 = por %p218, %p219
      %p221 = scmp.ne.s32.totalorder %s210, %s213
      %p222 = scmp.eq.s32.totalorder %s30, 7
      %p223 = por %p221, %p222
      %p224 = scmp.ne.s32.totalorder %s213, %s214
      %p225 = scmp.eq.s32.totalorder %s30, 0
      %p226 = por %p224, %p225
      %p227 = scmp.ne.s32.totalorder %s213, %s214
      %p228 = scmp.eq.s32.totalorder %s31, 7
      %p229 = por %p227, %p228
      %p231 = scmp.ne.s32.totalorder %s214, %s230
      %p232 = scmp.eq.s32.totalorder %s31, 0
      %p233 = por %p231, %p232
      %s234 = ssub.s32 %s32, %s51
      %s235 = ssub.s32 %s34, %s43
      %s236 = sor.u32 %s234, %s235
      %s237 = ssub.s32 %s33, %s47
      %s238 = sor.u32 %s236, %s237
      %p239 = scmp.eq.s32.totalorder %s238, 0
      %s241 = sadd.s32 %s240, 1
      %s242 = scalar_select %p239, %s240, %s241
      %p245 = pneg %p239
      %p246 = scmp.eq.s32.totalorder %s25, 7
      %p247 = por %p245, %p246
      %p248 = scmp.ne.s32.totalorder %s240, %s243
      %p249 = scmp.eq.s32.totalorder %s25, 0
      %p250 = por %p248, %p249
      %p251 = scmp.ne.s32.totalorder %s240, %s243
      %p252 = scmp.eq.s32.totalorder %s30, 7
      %p253 = por %p251, %p252
      %p254 = scmp.ne.s32.totalorder %s243, %s244
      %p255 = scmp.eq.s32.totalorder %s30, 0
      %p256 = por %p254, %p255
      %p257 = scmp.ne.s32.totalorder %s243, %s244
      %p258 = scmp.eq.s32.totalorder %s31, 7
      %p259 = por %p257, %p258
      %p261 = scmp.ne.s32.totalorder %s244, %s260
      %p262 = scmp.eq.s32.totalorder %s31, 0
      %p263 = por %p261, %p262
      %p264 = scmp.le.s32.totalorder 1, %s25
      %p265 = scmp.lt.s32.totalorder %s25, 9
      %p266 = pnand %p264, %p265
      %p267 = pneg %p266
      // Predicated region
      $region9: #{tpu_custom_call.1} parent=5 // pred_check
        _
      $region10: #{tpu_custom_call.1} parent=5 // pred_check_branch
        %269 = sbr.rel (%p266) target = $region12
      $region11: #{tpu_custom_call.1} parent=5 // pred_region
        %s270 = ssub.s32 %s25, 1
      $region12: #{tpu_custom_call.1} parent=5 // pred_fallthru
        _
      %p271 = scmp.lt.s32.totalorder %s25, 8
      // Predicated region
      $region13: #{tpu_custom_call.1} parent=5 // pred_check
        %p272 = pneg %p271
      $region14: #{tpu_custom_call.1} parent=5 // pred_check_branch
        %274 = sbr.rel (%p272) target = $region16
      $region15: #{tpu_custom_call.1} parent=5 // pred_region
        // Predicated region
        $region17: #{tpu_custom_call.1} parent=15 // pred_check
          %p275 = pneg %p64
        $region18: #{tpu_custom_call.1} parent=15 // pred_check_branch
          %277 = sbr.rel (%p275) target = $region20
        $region19: #{tpu_custom_call.1} parent=15 // pred_region
          %s278 = sand.u32 %s54, 1
          %s279 = scalar_lea.sflag [#allocation5], %s278
          %s280 = sand.u32 %s54, 1
          %s281 = smul.addr %s280, 8
          %s282 = scalar_lea.vmem [#allocation4], %s281
          %s284 = ssub.s32 128, 128
          %285 = vsyncadd %s279, %s284
          %s286 = smul.addr %s32, 2
          %s287 = smul.addr %s286, 64
          %s288 = scalar_lea.hbm %s0, %s287
          %s289 = sshll.u32 %s282, 4
          %s290 = int_to_ptr.vmem [resolvable:$true] %s289
          %295 = dma.hbm_to_vmem [thread:$0]  %s288, 128, %s290, %s279, 64, 64, 4
        $region20: #{tpu_custom_call.1} parent=15 // pred_fallthru
          _
        // Predicated region
        $region21: #{tpu_custom_call.1} parent=15 // pred_check
          %p296 = pneg %p90
        $region22: #{tpu_custom_call.1} parent=15 // pred_check_branch
          %298 = sbr.rel (%p296) target = $region24
        $region23: #{tpu_custom_call.1} parent=15 // pred_region
          %s299 = sand.u32 %s25, 1
          %s300 = scalar_lea.sflag [#allocation8], %s299
          %s301 = sand.u32 %s80, 1
          %s302 = smul.addr %s301, 64
          %s303 = scalar_lea.vmem [#allocation7], %s302
          %s305 = ssub.s32 1024, 1024
          %306 = vsyncadd %s300, %s305
          %s307 = smul.addr %s33, 64
          %s308 = scalar_lea.hbm %s1, %s307
          %s309 = sshll.u32 %s303, 4
          %s310 = int_to_ptr.vmem [resolvable:$true] %s309
          %315 = dma.hbm_to_vmem [thread:$0]  %s308, 1024, %s310, %s300, 256, 64, 4
        $region24: #{tpu_custom_call.1} parent=15 // pred_fallthru
          _
        // Predicated region
        $region25: #{tpu_custom_call.1} parent=15 // pred_check
          %p316 = pneg %p116
        $region26: #{tpu_custom_call.1} parent=15 // pred_check_branch
          %318 = sbr.rel (%p316) target = $region28
        $region27: #{tpu_custom_call.1} parent=15 // pred_region
          %p319 = scmp.lt.s32.totalorder %s33, 3
          %s320 = scalar_select %p319, %s33, 3
          %s321 = scalar_lea.vmem %s2, %s320
        $region28: #{tpu_custom_call.1} parent=15 // pred_fallthru
          _
        // Predicated region
        $region29: #{tpu_custom_call.1} parent=15 // pred_check
          %p322 = pneg %p142
        $region30: #{tpu_custom_call.1} parent=15 // pred_check_branch
          %324 = sbr.rel (%p322) target = $region32
        $region31: #{tpu_custom_call.1} parent=15 // pred_region
          %s325 = sand.u32 %s25, 1
          %s326 = scalar_lea.sflag [#allocation8], %s325
          %s327 = sand.u32 %s132, 1
          %s328 = smul.addr %s327, 64
          %s329 = scalar_lea.vmem [#allocation9], %s328
          %s331 = ssub.s32 1024, 1024
          %332 = vsyncadd %s326, %s331
          %s333 = smul.addr %s33, 64
          %s334 = scalar_lea.hbm %s3, %s333
          %s335 = sshll.u32 %s329, 4
          %s336 = int_to_ptr.vmem [resolvable:$true] %s335
          %341 = dma.hbm_to_vmem [thread:$0]  %s334, 1024, %s336, %s326, 256, 64, 4
        $region32: #{tpu_custom_call.1} parent=15 // pred_fallthru
          _
        // Predicated region
        $region33: #{tpu_custom_call.1} parent=15 // pred_check
          %p342 = pneg %p168
        $region34: #{tpu_custom_call.1} parent=15 // pred_check_branch
          %344 = sbr.rel (%p342) target = $region36
        $region35: #{tpu_custom_call.1} parent=15 // pred_region
          %p345 = scmp.lt.s32.totalorder %s33, 3
          %s346 = scalar_select %p345, %s33, 3
          %s347 = scalar_lea.vmem %s4, %s346
        $region36: #{tpu_custom_call.1} parent=15 // pred_fallthru
          _
        // Predicated region
        $region37: #{tpu_custom_call.1} parent=15 // pred_check
          %p348 = pneg %p194
        $region38: #{tpu_custom_call.1} parent=15 // pred_check_branch
          %350 = sbr.rel (%p348) target = $region40
        $region39: #{tpu_custom_call.1} parent=15 // pred_region
          %s351 = sand.u32 %s184, 1
          %s352 = scalar_lea.sflag [#allocation11], %s351
          %s353 = sand.u32 %s184, 1
          %s354 = smul.addr %s353, 64
          %s355 = scalar_lea.vmem [#allocation10], %s354
          %s357 = ssub.s32 1024, 1024
          %358 = vsyncadd %s352, %s357
          %s359 = smul.addr %s33, 64
          %s360 = scalar_lea.hbm %s5, %s359
          %s361 = sshll.u32 %s355, 4
          %s362 = int_to_ptr.vmem [resolvable:$true] %s361
          %367 = dma.hbm_to_vmem [thread:$0]  %s360, 1024, %s362, %s352, 256, 64, 4
        $region40: #{tpu_custom_call.1} parent=15 // pred_fallthru
          _
        // Predicated region
        $region41: #{tpu_custom_call.1} parent=15 // pred_check
          %p368 = pneg %p220
        $region42: #{tpu_custom_call.1} parent=15 // pred_check_branch
          %370 = sbr.rel (%p368) target = $region44
        $region43: #{tpu_custom_call.1} parent=15 // pred_region
          %p371 = scmp.lt.s32.totalorder %s33, 3
          %s372 = scalar_select %p371, %s33, 3
          %s373 = scalar_lea.vmem %s6, %s372
        $region44: #{tpu_custom_call.1} parent=15 // pred_fallthru
          _
      $region16: #{tpu_custom_call.1} parent=5 // pred_fallthru
        _
      %p374 = scmp.le.s32.totalorder 1, %s25
      %p375 = scmp.lt.s32.totalorder %s25, 9
      %p376 = pnand %p374, %p375
      %p377 = pneg %p376
      // Predicated region
      $region45: #{tpu_custom_call.1} parent=5 // pred_check
        _
      $region46: #{tpu_custom_call.1} parent=5 // pred_check_branch
        %379 = sbr.rel (%p376) target = $region48
      $region47: #{tpu_custom_call.1} parent=5 // pred_region
        %s380 = ssub.s32 %s25, 1
        %s381 = sand.u32 %s57, 1
        %s382 = scalar_lea.sflag [#allocation5], %s381
        %s383 = sand.u32 %s57, 1
        %s384 = smul.addr %s383, 8
        %s385 = scalar_lea.vmem [#allocation4], %s384
        // Predicated region
        $region49: #{tpu_custom_call.1} parent=47 // pred_check
          %p386 = pneg %p70
        $region50: #{tpu_custom_call.1} parent=47 // pred_check_branch
          %388 = sbr.rel (%p386) target = $region52
        $region51: #{tpu_custom_call.1} parent=47 // pred_region
          %389 = dma.done %s382, 128
        $region52: #{tpu_custom_call.1} parent=47 // pred_fallthru
          _
        %s390 = sand.u32 %s30, 1
        %s391 = scalar_lea.sflag [#allocation8], %s390
        %s392 = sand.u32 %s83, 1
        %s393 = smul.addr %s392, 64
        %s394 = scalar_lea.vmem [#allocation7], %s393
        // Predicated region
        $region53: #{tpu_custom_call.1} parent=47 // pred_check
          %p395 = pneg %p96
        $region54: #{tpu_custom_call.1} parent=47 // pred_check_branch
          %397 = sbr.rel (%p395) target = $region56
        $region55: #{tpu_custom_call.1} parent=47 // pred_region
          %398 = dma.done %s391, 1024
        $region56: #{tpu_custom_call.1} parent=47 // pred_fallthru
          _
        %s399 = sand.u32 %s30, 1
        %s400 = scalar_lea.sflag [#allocation8], %s399
        %s401 = sand.u32 %s135, 1
        %s402 = smul.addr %s401, 64
        %s403 = scalar_lea.vmem [#allocation9], %s402
        // Predicated region
        $region57: #{tpu_custom_call.1} parent=47 // pred_check
          %p404 = pneg %p148
        $region58: #{tpu_custom_call.1} parent=47 // pred_check_branch
          %406 = sbr.rel (%p404) target = $region60
        $region59: #{tpu_custom_call.1} parent=47 // pred_region
          %407 = dma.done %s400, 1024
        $region60: #{tpu_custom_call.1} parent=47 // pred_fallthru
          _
        %s408 = sand.u32 %s187, 1
        %s409 = scalar_lea.sflag [#allocation11], %s408
        %s410 = sand.u32 %s187, 1
        %s411 = smul.addr %s410, 64
        %s412 = scalar_lea.vmem [#allocation10], %s411
        // Predicated region
        $region61: #{tpu_custom_call.1} parent=47 // pred_check
          %p413 = pneg %p200
        $region62: #{tpu_custom_call.1} parent=47 // pred_check_branch
          %415 = sbr.rel (%p413) target = $region64
        $region63: #{tpu_custom_call.1} parent=47 // pred_region
          %416 = dma.done %s409, 1024
        $region64: #{tpu_custom_call.1} parent=47 // pred_fallthru
          _
        %s417 = sand.u32 %s57, 1
        %s418 = scalar_lea.sflag [#allocation5], %s417
        %s419 = sand.u32 %s57, 1
        %s420 = smul.addr %s419, 8
        %s421 = scalar_lea.vmem [#allocation4], %s420
        %p422 = pneg %p70
        %p423 = pneg %p67
        %s424 = sand.u32 %s30, 1
        %s425 = scalar_lea.sflag [#allocation8], %s424
        %s426 = sand.u32 %s83, 1
        %s427 = smul.addr %s426, 64
        %s428 = scalar_lea.vmem [#allocation7], %s427
        %p429 = pneg %p96
        %p430 = pneg %p93
        %p431 = scmp.lt.s32.totalorder %s36, 3
        %s432 = scalar_select %p431, %s36, 3
        %s433 = scalar_lea.vmem %s2, %s432
        %p434 = pneg %p122
        %p435 = pneg %p119
        %s436 = sand.u32 %s30, 1
        %s437 = scalar_lea.sflag [#allocation8], %s436
        %s438 = sand.u32 %s135, 1
        %s439 = smul.addr %s438, 64
        %s440 = scalar_lea.vmem [#allocation9], %s439
        %p441 = pneg %p148
        %p442 = pneg %p145
        %p443 = scmp.lt.s32.totalorder %s36, 3
        %s444 = scalar_select %p443, %s36, 3
        %s445 = scalar_lea.vmem %s4, %s444
        %p446 = pneg %p174
        %p447 = pneg %p171
        %s448 = sand.u32 %s187, 1
        %s449 = scalar_lea.sflag [#allocation11], %s448
        %s450 = sand.u32 %s187, 1
        %s451 = smul.addr %s450, 64
        %s452 = scalar_lea.vmem [#allocation10], %s451
        %p453 = pneg %p200
        %p454 = pneg %p197
        %p455 = scmp.lt.s32.totalorder %s36, 3
        %s456 = scalar_select %p455, %s36, 3
        %s457 = scalar_lea.vmem %s6, %s456
        %p458 = pneg %p226
        %p459 = pneg %p223
        %p460 = pneg %p256
        %p461 = pneg %p253
        %s462 = sand.u32 %s243, 1
        %s463 = scalar_lea.sflag [#allocation6], %s462
        %s464 = sand.u32 %s243, 1
        %s465 = smul.addr %s464, 8
        %s466 = scalar_lea.vmem [#allocation12], %s465
        %p467 = scmp.lt.s32.totalorder %s36, 3
        %s468 = scalar_select %p467, %s36, 3
        %s469 = scalar_lea.vmem %s2, %s468
        %p470 = scmp.lt.s32.totalorder %s36, 3
        %s471 = scalar_select %p470, %s36, 3
        %s472 = scalar_lea.vmem %s4, %s471
        %p473 = scmp.lt.s32.totalorder %s36, 3
        %s474 = scalar_select %p473, %s36, 3
        %s475 = scalar_lea.vmem %s6, %s474
        %s476 = smul.u32 2, %s37
        %p478 = scmp.eq.s32.totalorder %s37, 0
        // Predicated region
        $region65: #{tpu_custom_call.1} parent=47 // pred_check
          %p479 = pneg %p478
        $region66: #{tpu_custom_call.1} parent=47 // pred_check_branch
          %481 = sbr.rel (%p479) target = $region68
        $region67: #{tpu_custom_call.1} parent=47 // pred_region
          %v482 = vld [vmem:[%s385] sm:$0xf]
          %v483 = vld [vmem:[%s385 + $0x4] sm:$0xf]
          %v484 = vld [vmem:[%s403] sm:$0xf]
          %v485 = vld [vmem:[%s403 + $0x4] sm:$0xf]
          %v486 = vld [vmem:[%s403 + $0x8] sm:$0xf]
          %v487 = vld [vmem:[%s403 + $0xc] sm:$0xf]
          %v488 = vld [vmem:[%s403 + $0x10] sm:$0xf]
          %v489 = vld [vmem:[%s403 + $0x14] sm:$0xf]
          %v490 = vld [vmem:[%s403 + $0x18] sm:$0xf]
          %v491 = vld [vmem:[%s403 + $0x1c] sm:$0xf]
          %v492 = vld [vmem:[%s403 + $0x20] sm:$0xf]
          %v493 = vld [vmem:[%s403 + $0x24] sm:$0xf]
          %v494 = vld [vmem:[%s403 + $0x28] sm:$0xf]
          %v495 = vld [vmem:[%s403 + $0x2c] sm:$0xf]
          %v496 = vld [vmem:[%s403 + $0x30] sm:$0xf]
          %v497 = vld [vmem:[%s403 + $0x34] sm:$0xf]
          %v498 = vld [vmem:[%s403 + $0x38] sm:$0xf]
          %v499 = vld [vmem:[%s403 + $0x3c] sm:$0xf]
          %v500 = vld [vmem:[%s472] sm:$0x1]
          %v502 = vlaneseq
          %v503 = vshrl.u32 %v502, 7
          %v504 = vsub.s32 0, %v503
          %v505 = vrot.slane %v500, %v504
          %v509 = vunpack.c.l.b16 %v482
          %v510 = vunpack.c.l.b16 %v483
          %v511 = vpack.c.b16 %v510, %v509
          %v529 = vunpack.c.l.b16 %v484
          %v530 = vunpack.c.l.b16 %v485
          %v531 = vunpack.c.l.b16 %v486
          %v532 = vunpack.c.l.b16 %v487
          %v533 = vunpack.c.l.b16 %v488
          %v534 = vunpack.c.l.b16 %v489
          %v535 = vunpack.c.l.b16 %v490
          %v536 = vunpack.c.l.b16 %v491
          %v537 = vunpack.c.l.b16 %v492
          %v538 = vunpack.c.l.b16 %v493
          %v539 = vunpack.c.l.b16 %v494
          %v540 = vunpack.c.l.b16 %v495
          %v541 = vunpack.c.l.b16 %v496
          %v542 = vunpack.c.l.b16 %v497
          %v543 = vunpack.c.l.b16 %v498
          %v544 = vunpack.c.l.b16 %v499
          %v545 = vpack.c.b16 %v530, %v529
          %v546 = vpack.c.b16 %v532, %v531
          %v547 = vpack.c.b16 %v534, %v533
          %v548 = vpack.c.b16 %v536, %v535
          %v549 = vpack.c.b16 %v538, %v537
          %v550 = vpack.c.b16 %v540, %v539
          %v551 = vpack.c.b16 %v542, %v541
          %v552 = vpack.c.b16 %v544, %v543
          %561 = vmatprep.subr.bf16.mxu0 0
          %562 = vmatpush1.bf16.msra.mxu0 %v545
          %563 = vmatprep.subr.bf16.mxu0 0
          %564 = vmatpush1.bf16.msra.mxu0 %v546
          %565 = vmatprep.subr.bf16.mxu0 0
          %566 = vmatpush1.bf16.msra.mxu0 %v547
          %567 = vmatprep.subr.bf16.mxu0 0
          %568 = vmatpush1.bf16.msra.mxu0 %v548
          %569 = vmatprep.subr.bf16.mxu0 0
          %570 = vmatpush1.bf16.msra.mxu0 %v549
          %571 = vmatprep.subr.bf16.mxu0 0
          %572 = vmatpush1.bf16.msra.mxu0 %v550
          %573 = vmatprep.subr.bf16.mxu0 0
          %574 = vmatpush1.bf16.msra.mxu0 %v551
          %575 = vmatprep.subr.bf16.mxu0 0
          %576 = vmatpush1.bf16.msra.mxu0 %v552
          %577 = vmatprep.subr.bf16.mxu0 0
          %578 = vmatpush1.bf16.msra.mxu0 0
          %579 = vmatprep.subr.bf16.mxu0 0
          %580 = vmatpush1.bf16.msra.mxu0 0
          %581 = vmatprep.subr.bf16.mxu0 0
          %582 = vmatpush1.bf16.msra.mxu0 0
          %583 = vmatprep.subr.bf16.mxu0 0
          %584 = vmatpush1.bf16.msra.mxu0 0
          %585 = vmatprep.subr.bf16.mxu0 0
          %586 = vmatpush1.bf16.msra.mxu0 0
          %587 = vmatprep.subr.bf16.mxu0 0
          %588 = vmatpush1.bf16.msra.mxu0 0
          %589 = vmatprep.subr.bf16.mxu0 0
          %590 = vmatpush1.bf16.msra.mxu0 0
          %591 = vmatprep.subr.bf16.mxu0 0
          %592 = vmatpush1.bf16.msra.mxu0 0
          %593 = vmatprep.mubr.bf16.mxu0 0
          %594 = vmatmul.mubr.bf16.gmra.mrb[0].mxu0 %v511
          %v595 = vpop.f32.mrb[0].mxu0
          %v596 = vadd.f32 %v505, %v595
          %v597 = vpop.f32.mrb[0].mxu0
          %v598 = vpop.f32.mrb[0].mxu0
          %v599 = vadd.f32 %v505, %v598
          %v600 = vpop.f32.mrb[0].mxu0
          %601 = vdwg.mxu0
          %v602 = vld [vmem:[%s412] sm:$0xf]
          %v603 = vld [vmem:[%s412 + $0x4] sm:$0xf]
          %v604 = vld [vmem:[%s412 + $0x8] sm:$0xf]
          %v605 = vld [vmem:[%s412 + $0xc] sm:$0xf]
          %v606 = vld [vmem:[%s412 + $0x10] sm:$0xf]
          %v607 = vld [vmem:[%s412 + $0x14] sm:$0xf]
          %v608 = vld [vmem:[%s412 + $0x18] sm:$0xf]
          %v609 = vld [vmem:[%s412 + $0x1c] sm:$0xf]
          %v610 = vld [vmem:[%s412 + $0x20] sm:$0xf]
          %v611 = vld [vmem:[%s412 + $0x24] sm:$0xf]
          %v612 = vld [vmem:[%s412 + $0x28] sm:$0xf]
          %v613 = vld [vmem:[%s412 + $0x2c] sm:$0xf]
          %v614 = vld [vmem:[%s412 + $0x30] sm:$0xf]
          %v615 = vld [vmem:[%s412 + $0x34] sm:$0xf]
          %v616 = vld [vmem:[%s412 + $0x38] sm:$0xf]
          %v617 = vld [vmem:[%s412 + $0x3c] sm:$0xf]
          %v618 = vld [vmem:[%s475] sm:$0x1]
          %v620 = vlaneseq
          %v621 = vshrl.u32 %v620, 7
          %v622 = vsub.s32 0, %v621
          %v623 = vrot.slane %v618, %v622
          %v641 = vunpack.c.l.b16 %v602
          %v642 = vunpack.c.l.b16 %v603
          %v643 = vunpack.c.l.b16 %v604
          %v644 = vunpack.c.l.b16 %v605
          %v645 = vunpack.c.l.b16 %v606
          %v646 = vunpack.c.l.b16 %v607
          %v647 = vunpack.c.l.b16 %v608
          %v648 = vunpack.c.l.b16 %v609
          %v649 = vunpack.c.l.b16 %v610
          %v650 = vunpack.c.l.b16 %v611
          %v651 = vunpack.c.l.b16 %v612
          %v652 = vunpack.c.l.b16 %v613
          %v653 = vunpack.c.l.b16 %v614
          %v654 = vunpack.c.l.b16 %v615
          %v655 = vunpack.c.l.b16 %v616
          %v656 = vunpack.c.l.b16 %v617
          %v657 = vpack.c.b16 %v642, %v641
          %v658 = vpack.c.b16 %v644, %v643
          %v659 = vpack.c.b16 %v646, %v645
          %v660 = vpack.c.b16 %v648, %v647
          %v661 = vpack.c.b16 %v650, %v649
          %v662 = vpack.c.b16 %v652, %v651
          %v663 = vpack.c.b16 %v654, %v653
          %v664 = vpack.c.b16 %v656, %v655
          %673 = vmatprep.subr.bf16.mxu0 0
          %674 = vmatpush1.bf16.msra.mxu0 %v657
          %675 = vmatprep.subr.bf16.mxu0 0
          %676 = vmatpush1.bf16.msra.mxu0 %v658
          %677 = vmatprep.subr.bf16.mxu0 0
          %678 = vmatpush1.bf16.msra.mxu0 %v659
          %679 = vmatprep.subr.bf16.mxu0 0
          %680 = vmatpush1.bf16.msra.mxu0 %v660
          %681 = vmatprep.subr.bf16.mxu0 0
          %682 = vmatpush1.bf16.msra.mxu0 %v661
          %683 = vmatprep.subr.bf16.mxu0 0
          %684 = vmatpush1.bf16.msra.mxu0 %v662
          %685 = vmatprep.subr.bf16.mxu0 0
          %686 = vmatpush1.bf16.msra.mxu0 %v663
          %687 = vmatprep.subr.bf16.mxu0 0
          %688 = vmatpush1.bf16.msra.mxu0 %v664
          %689 = vmatprep.subr.bf16.mxu0 0
          %690 = vmatpush1.bf16.msra.mxu0 0
          %691 = vmatprep.subr.bf16.mxu0 0
          %692 = vmatpush1.bf16.msra.mxu0 0
          %693 = vmatprep.subr.bf16.mxu0 0
          %694 = vmatpush1.bf16.msra.mxu0 0
          %695 = vmatprep.subr.bf16.mxu0 0
          %696 = vmatpush1.bf16.msra.mxu0 0
          %697 = vmatprep.subr.bf16.mxu0 0
          %698 = vmatpush1.bf16.msra.mxu0 0
          %699 = vmatprep.subr.bf16.mxu0 0
          %700 = vmatpush1.bf16.msra.mxu0 0
          %701 = vmatprep.subr.bf16.mxu0 0
          %702 = vmatpush1.bf16.msra.mxu0 0
          %703 = vmatprep.subr.bf16.mxu0 0
          %704 = vmatpush1.bf16.msra.mxu0 0
          %705 = vmatprep.mubr.bf16.mxu0 0
          %706 = vmatmul.mubr.bf16.gmra.mrb[0].mxu0 %v511
          %v707 = vpop.f32.mrb[0].mxu0
          %v708 = vadd.f32 %v623, %v707
          %v709 = vpop.f32.mrb[0].mxu0
          %v710 = vpop.f32.mrb[0].mxu0
          %v711 = vadd.f32 %v623, %v710
          %v712 = vpop.f32.mrb[0].mxu0
          %713 = vdwg.mxu0
          %v714 = vpack.c.bf16 %v599, %v596
          %715 = vst [vmem:[#allocation2] sm:$0xff] %v714
          %v716 = vpack.c.bf16 %v711, %v708
          %717 = vst [vmem:[#allocation3] sm:$0xff] %v716
        $region68: #{tpu_custom_call.1} parent=47 // pred_fallthru
          _
        %s718 = smul.u32 %s37, 16
        %s719 = sshra.s32 %s718, 3
        %s720 = sand.u32 %s718, 7
        %s721 = smul.addr %s719, 4
        %s722 = scalar_lea.vmem %s385, %s721 [#allocation4]
        %v723 = vld [vmem:[%s722] sm:$0xf]
        %v724 = vld [vmem:[%s722 + $0x4] sm:$0xf]
        %v725 = vld [vmem:[%s394] sm:$0xf]
        %v726 = vld [vmem:[%s394 + $0x4] sm:$0xf]
        %v727 = vld [vmem:[%s394 + $0x8] sm:$0xf]
        %v728 = vld [vmem:[%s394 + $0xc] sm:$0xf]
        %v729 = vld [vmem:[%s394 + $0x10] sm:$0xf]
        %v730 = vld [vmem:[%s394 + $0x14] sm:$0xf]
        %v731 = vld [vmem:[%s394 + $0x18] sm:$0xf]
        %v732 = vld [vmem:[%s394 + $0x1c] sm:$0xf]
        %v733 = vld [vmem:[%s394 + $0x20] sm:$0xf]
        %v734 = vld [vmem:[%s394 + $0x24] sm:$0xf]
        %v735 = vld [vmem:[%s394 + $0x28] sm:$0xf]
        %v736 = vld [vmem:[%s394 + $0x2c] sm:$0xf]
        %v737 = vld [vmem:[%s394 + $0x30] sm:$0xf]
        %v738 = vld [vmem:[%s394 + $0x34] sm:$0xf]
        %v739 = vld [vmem:[%s394 + $0x38] sm:$0xf]
        %v740 = vld [vmem:[%s394 + $0x3c] sm:$0xf]
        %v741 = vld [vmem:[%s469] sm:$0x1]
        %v743 = vlaneseq
        %v744 = vshrl.u32 %v743, 7
        %v745 = vsub.s32 0, %v744
        %v746 = vrot.slane %v741, %v745
        %v750 = vunpack.c.l.b16 %v723
        %v751 = vunpack.c.l.b16 %v724
        %v752 = vpack.c.b16 %v751, %v750
        %v770 = vunpack.c.l.b16 %v725
        %v771 = vunpack.c.l.b16 %v726
        %v772 = vunpack.c.l.b16 %v727
        %v773 = vunpack.c.l.b16 %v728
        %v774 = vunpack.c.l.b16 %v729
        %v775 = vunpack.c.l.b16 %v730
        %v776 = vunpack.c.l.b16 %v731
        %v777 = vunpack.c.l.b16 %v732
        %v778 = vunpack.c.l.b16 %v733
        %v779 = vunpack.c.l.b16 %v734
        %v780 = vunpack.c.l.b16 %v735
        %v781 = vunpack.c.l.b16 %v736
        %v782 = vunpack.c.l.b16 %v737
        %v783 = vunpack.c.l.b16 %v738
        %v784 = vunpack.c.l.b16 %v739
        %v785 = vunpack.c.l.b16 %v740
        %v786 = vpack.c.b16 %v771, %v770
        %v787 = vpack.c.b16 %v773, %v772
        %v788 = vpack.c.b16 %v775, %v774
        %v789 = vpack.c.b16 %v777, %v776
        %v790 = vpack.c.b16 %v779, %v778
        %v791 = vpack.c.b16 %v781, %v780
        %v792 = vpack.c.b16 %v783, %v782
        %v793 = vpack.c.b16 %v785, %v784
        %802 = vmatprep.subr.bf16.mxu0 0
        %803 = vmatpush1.bf16.msra.mxu0 %v786
        %804 = vmatprep.subr.bf16.mxu0 0
        %805 = vmatpush1.bf16.msra.mxu0 %v787
        %806 = vmatprep.subr.bf16.mxu0 0
        %807 = vmatpush1.bf16.msra.mxu0 %v788
        %808 = vmatprep.subr.bf16.mxu0 0
        %809 = vmatpush1.bf16.msra.mxu0 %v789
        %810 = vmatprep.subr.bf16.mxu0 0
        %811 = vmatpush1.bf16.msra.mxu0 %v790
        %812 = vmatprep.subr.bf16.mxu0 0
        %813 = vmatpush1.bf16.msra.mxu0 %v791
        %814 = vmatprep.subr.bf16.mxu0 0
        %815 = vmatpush1.bf16.msra.mxu0 %v792
        %816 = vmatprep.subr.bf16.mxu0 0
        %817 = vmatpush1.bf16.msra.mxu0 %v793
        %818 = vmatprep.subr.bf16.mxu0 0
        %819 = vmatpush1.bf16.msra.mxu0 0
        %820 = vmatprep.subr.bf16.mxu0 0
        %821 = vmatpush1.bf16.msra.mxu0 0
        %822 = vmatprep.subr.bf16.mxu0 0
        %823 = vmatpush1.bf16.msra.mxu0 0
        %824 = vmatprep.subr.bf16.mxu0 0
        %825 = vmatpush1.bf16.msra.mxu0 0
        %826 = vmatprep.subr.bf16.mxu0 0
        %827 = vmatpush1.bf16.msra.mxu0 0
        %828 = vmatprep.subr.bf16.mxu0 0
        %829 = vmatpush1.bf16.msra.mxu0 0
        %830 = vmatprep.subr.bf16.mxu0 0
        %831 = vmatpush1.bf16.msra.mxu0 0
        %832 = vmatprep.subr.bf16.mxu0 0
        %833 = vmatpush1.bf16.msra.mxu0 0
        %834 = vmatprep.mubr.bf16.mxu0 0
        %835 = vmatmul.mubr.bf16.gmra.mrb[0].mxu0 %v752
        %v836 = vpop.f32.mrb[0].mxu0
        %v837 = vadd.f32 %v746, %v836
        %v838 = vpop.f32.mrb[0].mxu0
        %v839 = vpop.f32.mrb[0].mxu0
        %v840 = vadd.f32 %v746, %v839
        %v841 = vpop.f32.mrb[0].mxu0
        %842 = vdwg.mxu0
        %v843 = vpack.c.bf16 %v840, %v837
        %v844 = vld [vmem:[#allocation2] sm:$0xff]
        %845 = vmatprep.subr.bf16.mxu0 0
        %846 = vmatpush1.bf16.xpose.msra.mxu0 %v844
        %847 = vmatprep.subr.bf16.mxu0 0
        %848 = vmatpush1.bf16.xpose.msra.mxu0 0
        %849 = vmatprep.subr.bf16.mxu0 0
        %850 = vmatpush1.bf16.xpose.msra.mxu0 0
        %851 = vmatprep.subr.bf16.mxu0 0
        %852 = vmatpush1.bf16.xpose.msra.mxu0 0
        %853 = vmatprep.subr.bf16.mxu0 0
        %854 = vmatpush1.bf16.xpose.msra.mxu0 0
        %855 = vmatprep.subr.bf16.mxu0 0
        %856 = vmatpush1.bf16.xpose.msra.mxu0 0
        %857 = vmatprep.subr.bf16.mxu0 0
        %858 = vmatpush1.bf16.xpose.msra.mxu0 0
        %859 = vmatprep.subr.bf16.mxu0 0
        %860 = vmatpush1.bf16.xpose.msra.mxu0 0
        %861 = vmatprep.subr.bf16.mxu0 0
        %862 = vmatpush1.bf16.xpose.msra.mxu0 0
        %863 = vmatprep.subr.bf16.mxu0 0
        %864 = vmatpush1.bf16.xpose.msra.mxu0 0
        %865 = vmatprep.subr.bf16.mxu0 0
        %866 = vmatpush1.bf16.xpose.msra.mxu0 0
        %867 = vmatprep.subr.bf16.mxu0 0
        %868 = vmatpush1.bf16.xpose.msra.mxu0 0
        %869 = vmatprep.subr.bf16.mxu0 0
        %870 = vmatpush1.bf16.xpose.msra.mxu0 0
        %871 = vmatprep.subr.bf16.mxu0 0
        %872 = vmatpush1.bf16.xpose.msra.mxu0 0
        %873 = vmatprep.subr.bf16.mxu0 0
        %874 = vmatpush1.bf16.xpose.msra.mxu0 0
        %875 = vmatprep.subr.bf16.mxu0 0
        %876 = vmatpush1.bf16.xpose.msra.mxu0 0
        %877 = vmatprep.mubr.bf16.mxu0 0
        %878 = vmatmul.mubr.bf16.gmra.mrb[0].mxu0 %v843
        %v879 = vpop.f32.mrb[0].mxu0
        %v880 = vadd.f32 0.0, %v879
        %v881 = vpop.f32.mrb[0].mxu0
        %v882 = vpop.f32.mrb[0].mxu0
        %v883 = vadd.f32 0.0, %v882
        %v884 = vpop.f32.mrb[0].mxu0
        %885 = vdwg.mxu0
        %vm886 = vcmask 130048
        %v887 = vsel %vm886, %v880, -inf
        %888 = vmax.xlane.f32.xlu0 %v887
        %v889 = vpop.xlane.xlu0 %888
        %v890 = vsel %vm886, %v883, -inf
        %891 = vmax.xlane.f32.xlu0 %v890
        %v892 = vpop.xlane.xlu0 %891
        %v893 = vsub.f32 %v880, %v889
        %v894 = vsub.f32 %v883, %v892
        %v895 = vmul.f32 %v893, 1.442695
        %v896 = vpow.pop %v895
        %v897 = vmul.f32 %v894, 1.442695
        %v898 = vpow.pop %v897
        %v899 = vsel %vm886, %v896, 0.0
        %900 = vadd.xlane.f32.xlu0 %v899
        %v901 = vpop.xlane.xlu0 %900
        %v902 = vsel %vm886, %v898, 0.0
        %903 = vadd.xlane.f32.xlu0 %v902
        %v904 = vpop.xlane.xlu0 %903
        %v905 = vpack.c.bf16 %v898, %v896
        %v906 = vld [vmem:[#allocation3] sm:$0xff]
        %v908 = vsel %vm886, %v905, 0
        %910 = vmatprep.subr.bf16.mxu0 0
        %911 = vmatpush1.bf16.msra.mxu0 %v906
        %912 = vmatprep.subr.bf16.mxu0 0
        %913 = vmatpush1.bf16.msra.mxu0 0
        %914 = vmatprep.subr.bf16.mxu0 0
        %915 = vmatpush1.bf16.msra.mxu0 0
        %916 = vmatprep.subr.bf16.mxu0 0
        %917 = vmatpush1.bf16.msra.mxu0 0
        %918 = vmatprep.subr.bf16.mxu0 0
        %919 = vmatpush1.bf16.msra.mxu0 0
        %920 = vmatprep.subr.bf16.mxu0 0
        %921 = vmatpush1.bf16.msra.mxu0 0
        %922 = vmatprep.subr.bf16.mxu0 0
        %923 = vmatpush1.bf16.msra.mxu0 0
        %924 = vmatprep.subr.bf16.mxu0 0
        %925 = vmatpush1.bf16.msra.mxu0 0
        %926 = vmatprep.subr.bf16.mxu0 0
        %927 = vmatpush1.bf16.msra.mxu0 0
        %928 = vmatprep.subr.bf16.mxu0 0
        %929 = vmatpush1.bf16.msra.mxu0 0
        %930 = vmatprep.subr.bf16.mxu0 0
        %931 = vmatpush1.bf16.msra.mxu0 0
        %932 = vmatprep.subr.bf16.mxu0 0
        %933 = vmatpush1.bf16.msra.mxu0 0
        %934 = vmatprep.subr.bf16.mxu0 0
        %935 = vmatpush1.bf16.msra.mxu0 0
        %936 = vmatprep.subr.bf16.mxu0 0
        %937 = vmatpush1.bf16.msra.mxu0 0
        %938 = vmatprep.subr.bf16.mxu0 0
        %939 = vmatpush1.bf16.msra.mxu0 0
        %940 = vmatprep.subr.bf16.mxu0 0
        %941 = vmatpush1.bf16.msra.mxu0 0
        %942 = vmatprep.mubr.bf16.mxu0 0
        %943 = vmatmul.mubr.bf16.gmra.mrb[0].mxu0 %v908
        %v944 = vpop.f32.mrb[0].mxu0
        %v945 = vadd.f32 0.0, %v944
        %v946 = vpop.f32.mrb[0].mxu0
        %v947 = vpop.f32.mrb[0].mxu0
        %v948 = vadd.f32 0.0, %v947
        %v949 = vpop.f32.mrb[0].mxu0
        %950 = vdwg.mxu0
        %v951 = vrcp.pop %v901
        %v952 = vrcp.pop %v904
        %v953 = vmul.f32 %v945, %v951
        %v954 = vmul.f32 %v948, %v952
        %v955 = vadd.f32 %v953, %v837
        %v956 = vadd.f32 %v954, %v840
        %v957 = vpack.c.bf16 %v956, %v955
        %v959 = vunpack.c.l.b16 %v957
        %v960 = vunpack.c.h.b16 %v957
        %v961 = vpack.c.b16 %v959, %v959
        %v962 = vpack.c.b16 %v960, %v960
        %965 = vst [vmem:[%s466] sm:$0xf] %v961
        %966 = vst [vmem:[%s466 + $0x4] sm:$0xf] %v962
        %s967 = sand.u32 %s243, 1
        %s968 = scalar_lea.sflag [#allocation6], %s967
        %s969 = sand.u32 %s243, 1
        %s970 = smul.addr %s969, 8
        %s971 = scalar_lea.vmem [#allocation12], %s970
        // Predicated region
        $region69: #{tpu_custom_call.1} parent=47 // pred_check
          %p972 = pneg %p253
        $region70: #{tpu_custom_call.1} parent=47 // pred_check_branch
          %974 = sbr.rel (%p972) target = $region72
        $region71: #{tpu_custom_call.1} parent=47 // pred_region
          %s975 = smul.u32 2, %s37
          %s977 = ssub.s32 128, 128
          %978 = vsyncadd %s968, %s977
          %s979 = smul.addr %s975, 4
          %s980 = sadd.s32 %s36, %s979
          %s981 = smul.addr %s35, 8
          %s982 = sadd.s32 %s980, %s981
          %s983 = smul.addr %s982, 64
          %s984 = scalar_lea.hbm %s7, %s983
          %s985 = sshll.u32 %s971, 4
          %s986 = int_to_ptr.vmem [resolvable:$true] %s985
          %991 = dma.vmem_to_hbm [thread:$0]  %s986, 128, %s984, %s968, 64, 256, 4
        $region72: #{tpu_custom_call.1} parent=47 // pred_fallthru
          _
      $region48: #{tpu_custom_call.1} parent=5 // pred_fallthru
        _
      %p992 = scmp.le.s32.totalorder 2, %s25
      // Predicated region
      $region73: #{tpu_custom_call.1} parent=5 // pred_check
        %p993 = pneg %p992
      $region74: #{tpu_custom_call.1} parent=5 // pred_check_branch
        %995 = sbr.rel (%p993) target = $region76
      $region75: #{tpu_custom_call.1} parent=5 // pred_region
        %s996 = ssub.s32 %s25, 2
        // Predicated region
        $region77: #{tpu_custom_call.1} parent=75 // pred_check
          %p997 = pneg %p259
        $region78: #{tpu_custom_call.1} parent=75 // pred_check_branch
          %999 = sbr.rel (%p997) target = $region80
        $region79: #{tpu_custom_call.1} parent=75 // pred_region
          %s1000 = sand.u32 %s244, 1
          %s1001 = scalar_lea.sflag [#allocation6], %s1000
          %s1002 = sand.u32 %s244, 1
          %s1003 = smul.addr %s1002, 8
          %s1004 = scalar_lea.vmem [#allocation12], %s1003
          %1005 = dma.done %s1001, 128
        $region80: #{tpu_custom_call.1} parent=75 // pred_fallthru
          _
      $region76: #{tpu_custom_call.1} parent=5 // pred_fallthru
        _
    $region6: #{tpu_custom_call.1} parent=1 // loop_footer
      %s29 = sadd.s32 1, %s25
    $region7: #{tpu_custom_call.1} parent=1 // loop_footer_branch
      %24 = sbr.rel target = $region3
    $region8: #{tpu_custom_call.1} parent=1 // loop_exit
      _
    %1006 = vsyncpa [#allocation5], 1
    %s1007 = scalar_lea.sflag [#allocation5], 1
    %1008 = vsyncpa %s1007, 1
    %1009 = vsyncpa [#allocation8], 1
    %s1010 = scalar_lea.sflag [#allocation8], 1
    %1011 = vsyncpa %s1010, 1
    %1012 = vsyncpa [#allocation11], 1
    %s1013 = scalar_lea.sflag [#allocation11], 1
    %1014 = vsyncpa %s1013, 1
    %1015 = vsyncpa [#allocation6], 1
    %s1016 = scalar_lea.sflag [#allocation6], 1
    %1017 = vsyncpa %s1016, 1

</llo_original>
